<compile_context>
chip_gen: v6e
topology: v6e:2x2x1
jax: 0.10.0
libtpu: 0.0.40
codegen_flags: <defaults>
</compile_context>

<pallas_src>
import math

import jax
import jax.numpy as jnp
from jax.experimental import pallas as pl
from jax.experimental.pallas import tpu as pltpu

OBS_SIZE = 2      # MountainCar observation: (position, velocity)
N_ACTIONS = 3     # MountainCar discrete actions
HIDDEN = 128
OUT_PAD = 8       # head padded to one f32 sublane group (8), not 128 lanes


def _round_up(n, m):
    return ((n + m - 1) // m) * m


def _mlp_kernel(x_ref,
                w1_ref, b1_ref,
                w2_ref, b2_ref,
                w3_ref, b3_ref,
                w4_ref, b4_ref,
                o_ref):
    """One batch tile of the fused 4-layer MLP. Weights are VMEM-resident."""
    x = x_ref[...].astype(jnp.float32)          # (tb, obs)  -- mirrors x.float()
    w1 = w1_ref[...]                            # (obs, 128) f32

    # ---- Layer 1 on the VPU (K = obs_size is far too small for the MXU) ----
    h = b1_ref[...] + x[:, 0:1] * w1[0:1, :]
    for k in range(1, w1_ref.shape[0]):         # obs_size is static -> unrolled FMAs
        h = h + x[:, k:k + 1] * w1[k:k + 1, :]
    h = jnp.maximum(h, 0.0)

    # ---- Layers 2/3: bf16 operands on the MXU, f32 accumulation -------------
    h = jnp.dot(h.astype(jnp.bfloat16), w2_ref[...],
                preferred_element_type=jnp.float32) + b2_ref[...]
    h = jnp.maximum(h, 0.0)

    h = jnp.dot(h.astype(jnp.bfloat16), w3_ref[...],
                preferred_element_type=jnp.float32) + b3_ref[...]
    h = jnp.maximum(h, 0.0)

    # ---- Layer 4: narrow head (N = 8 padded columns) -> tiny (tb, 8) store --
    out = jnp.dot(h.astype(jnp.bfloat16), w4_ref[...],
                  preferred_element_type=jnp.float32) + b4_ref[...]
    o_ref[...] = out.astype(o_ref.dtype)


def _prepare_kernel_params(params):
    """f32 params -> kernel layout: w1/biases f32, w2/w3/w4 bf16, head padded to 8 cols."""
    (w1, b1), (w2, b2), (w3, b3), (w4, b4) = params
    n_actions = w4.shape[1]
    out_cols = _round_up(n_actions, OUT_PAD)
    pad = out_cols - n_actions
    w4p = jnp.pad(w4, ((0, 0), (0, pad))).astype(jnp.bfloat16)   # (hidden, 8) bf16
    b4p = jnp.pad(b4, ((0, 0), (0, pad)))                        # (1, 8) f32
    return (w1, b1,
            w2.astype(jnp.bfloat16), b2,
            w3.astype(jnp.bfloat16), b3,
            w4p, b4p), n_actions


def net_forward(x, params, block_b=1024):
    """params = ((w1,b1),(w2,b2),(w3,b3),(w4,b4)); wi are [in, out], bi are [1, out] f32."""
    kparams, n_actions = _prepare_kernel_params(params)
    w1, b1, w2, b2, w3, b3, w4p, b4p = kparams

    batch, obs = x.shape
    hidden = w2.shape[0]
    out_cols = w4p.shape[1]

    # Batch tile: multiple of 8 sublanes, capped at block_b, and capped at ~half
    # the batch so there are >=2 grid steps (dual-TC sharding on v7x) whenever
    # the batch is large enough to split.
    b8 = _round_up(batch, 8)
    tb = min(block_b, max(8, _round_up((b8 + 1) // 2, 8)))
    b_pad = _round_up(batch, tb)
    if b_pad != batch:
        x = jnp.pad(x, ((0, b_pad - batch), (0, 0)))
    nb = b_pad // tb

    vmem = pltpu.MemorySpace.VMEM
    # Weights/biases: full-array blocks, constant index_map -> resident in VMEM.
    const_spec = lambda arr: pl.BlockSpec(arr.shape, lambda i: (0, 0), memory_space=vmem)

    flops = 2 * b_pad * (obs * hidden + 2 * hidden * hidden + hidden * out_cols)
    bytes_accessed = int(
        x.size * 4
        + w1.size * 4 + b1.size * 4
        + w2.size * 2 + b2.size * 4
        + w3.size * 2 + b3.size * 4
        + w4p.size * 2 + b4p.size * 4
        + b_pad * out_cols * 4)

    out_padded = pl.pallas_call(
        _mlp_kernel,
        out_shape=jax.ShapeDtypeStruct((b_pad, out_cols), jnp.float32),
        grid=(nb,),
        in_specs=[
            pl.BlockSpec((tb, obs), lambda i: (i, 0), memory_space=vmem),  # x tile streams
            const_spec(w1), const_spec(b1),
            const_spec(w2), const_spec(b2),
            const_spec(w3), const_spec(b3),
            const_spec(w4p), const_spec(b4p),
        ],
        out_specs=pl.BlockSpec((tb, out_cols), lambda i: (i, 0), memory_space=vmem),
        compiler_params=pltpu.CompilerParams(
            dimension_semantics=("parallel",)),        # shard batch across TCs on v7x
        cost_estimate=pl.CostEstimate(
            flops=flops, transcendentals=0, bytes_accessed=bytes_accessed),
    )(x, w1, b1, w2, b2, w3, b3, w4p, b4p)

    # Cheap: re-reads only a (b_pad, 8) f32 array (32 B/row), not 128 padded lanes.
    return out_padded[:batch, :n_actions]


def init_params(key, obs_size=OBS_SIZE, n_actions=N_ACTIONS, hidden=HIDDEN):
    """PyTorch nn.Linear-style init: U(-1/sqrt(fan_in), 1/sqrt(fan_in)), f32."""
    sizes = [(obs_size, hidden), (hidden, hidden), (hidden, hidden), (hidden, n_actions)]
    params = []
    for fan_in, fan_out in sizes:
        key, kw, kb = jax.random.split(key, 3)
        bound = 1.0 / math.sqrt(fan_in)
        w = jax.random.uniform(kw, (fan_in, fan_out), jnp.float32, -bound, bound)
        b = jax.random.uniform(kb, (fan_out,), jnp.float32, -bound, bound)
        params.append((w, b.reshape(1, fan_out)))   # bias kept 2D for lane-aligned broadcast
    return params


def reference_forward_f32(x, params):
    """Pure-f32 reference matching the torch module semantics."""
    h = x.astype(jnp.float32)
    for i, (w, b) in enumerate(params):
        h = jnp.dot(h, w, precision=jax.lax.Precision.HIGHEST) + b
        if i < len(params) - 1:
            h = jnp.maximum(h, 0.0)
    return h


def reference_forward_mixed(x, params):
    """Plain-JAX reference that mirrors the kernel's dtype strategy exactly."""
    (w1, b1), (w2, b2), (w3, b3), (w4, b4) = params
    x = x.astype(jnp.float32)
    h = b1 + x[:, 0:1] * w1[0:1, :]
    for k in range(1, w1.shape[0]):
        h = h + x[:, k:k + 1] * w1[k:k + 1, :]
    h = jnp.maximum(h, 0.0)
    h = jnp.maximum(jnp.dot(h.astype(jnp.bfloat16), w2.astype(jnp.bfloat16),
                            preferred_element_type=jnp.float32) + b2, 0.0)
    h = jnp.maximum(jnp.dot(h.astype(jnp.bfloat16), w3.astype(jnp.bfloat16),
                            preferred_element_type=jnp.float32) + b3, 0.0)
    return jnp.dot(h.astype(jnp.bfloat16), w4.astype(jnp.bfloat16),
                   preferred_element_type=jnp.float32) + b4


if __name__ == "__main__":
    key = jax.random.PRNGKey(0)
    key, kx = jax.random.split(key)
    params = init_params(key)

    # Small batch (single grid step, tile = 8 rows).
    batch = 8
    x = jax.random.normal(kx, (batch, OBS_SIZE), jnp.float32)
    out = jax.block_until_ready(net_forward(x, params))
    assert out.shape == (batch, N_ACTIONS)
    assert jnp.allclose(out, reference_forward_mixed(x, params), atol=2e-3, rtol=2e-3), \
        "Pallas output mismatch vs dtype-matched reference"
    assert jnp.allclose(out, reference_forward_f32(x, params), atol=5e-2, rtol=5e-2), \
        "Pallas output mismatch vs f32 reference"

    # Batch not a multiple of the tile: exercises zero-padding + slice-off path
    # (2 grid steps of 104 rows, 8 padded garbage rows dropped).
    key, kx1 = jax.random.split(key)
    x_odd = jax.random.normal(kx1, (200, OBS_SIZE), jnp.float32)
    out_odd = jax.block_until_ready(net_forward(x_odd, params))
    assert out_odd.shape == (200, N_ACTIONS)
    assert jnp.allclose(out_odd, reference_forward_mixed(x_odd, params), atol=2e-3, rtol=2e-3), \
        "Pallas (padded batch) output mismatch vs dtype-matched reference"

    # Larger batch exercising the streaming grid (2 tiles of 256 rows) with
    # VMEM-resident weights and 'parallel' semantics (dual-TC on v7x).
    key, kx2 = jax.random.split(key)
    x_big = jax.random.normal(kx2, (512, OBS_SIZE), jnp.float32)
    out_big = jax.block_until_ready(net_forward(x_big, params))
    assert out_big.shape == (512, N_ACTIONS)
    assert jnp.allclose(out_big, reference_forward_mixed(x_big, params), atol=2e-3, rtol=2e-3), \
        "Pallas (batched grid) output mismatch vs dtype-matched reference"

    print("KERNEL_OK")
</pallas_src>

<mosaic_0001>
module attributes {stable_mosaic.version = 11 : i64} {
  func.func @_mlp_kernel(%arg0: i32, %arg1: memref<8x2xf32, #tpu.memory_space<vmem>>, %arg2: memref<2x128xf32, #tpu.memory_space<vmem>>, %arg3: memref<1x128xf32, #tpu.memory_space<vmem>>, %arg4: memref<128x128xbf16, #tpu.memory_space<vmem>>, %arg5: memref<1x128xf32, #tpu.memory_space<vmem>>, %arg6: memref<128x128xbf16, #tpu.memory_space<vmem>>, %arg7: memref<1x128xf32, #tpu.memory_space<vmem>>, %arg8: memref<128x8xbf16, #tpu.memory_space<vmem>>, %arg9: memref<1x8xf32, #tpu.memory_space<vmem>>, %arg10: memref<8x8xf32, #tpu.memory_space<vmem>>) attributes {dimension_semantics = [#tpu.dimension_semantics<parallel>], iteration_bounds = array<i64: 1>, scalar_prefetch = 0 : i64, scratch_operands = 0 : i64, tpu.core_type = #tpu.core_type<tc>, window_params = [{transform_indices = @transform_0, window_bounds = array<i64: 8, 2>}, {pipeline_mode = #tpu.pipeline_mode<synchronous>, transform_indices = @transform_1, window_bounds = array<i64: 2, 128>}, {pipeline_mode = #tpu.pipeline_mode<synchronous>, transform_indices = @transform_2, window_bounds = array<i64: 1, 128>}, {pipeline_mode = #tpu.pipeline_mode<synchronous>, transform_indices = @transform_3, window_bounds = array<i64: 128, 128>}, {pipeline_mode = #tpu.pipeline_mode<synchronous>, transform_indices = @transform_4, window_bounds = array<i64: 1, 128>}, {pipeline_mode = #tpu.pipeline_mode<synchronous>, transform_indices = @transform_5, window_bounds = array<i64: 128, 128>}, {pipeline_mode = #tpu.pipeline_mode<synchronous>, transform_indices = @transform_6, window_bounds = array<i64: 1, 128>}, {pipeline_mode = #tpu.pipeline_mode<synchronous>, transform_indices = @transform_7, window_bounds = array<i64: 128, 8>}, {pipeline_mode = #tpu.pipeline_mode<synchronous>, transform_indices = @transform_8, window_bounds = array<i64: 1, 8>}, {transform_indices = @transform_9, window_bounds = array<i64: 8, 8>}]} {
    %c0 = arith.constant 0 : index
    %c0_0 = arith.constant 0 : index
    %0 = vector.load %arg1[%c0, %c0_0] : memref<8x2xf32, #tpu.memory_space<vmem>>, vector<8x2xf32>
    %c0_1 = arith.constant 0 : index
    %c0_2 = arith.constant 0 : index
    %1 = vector.load %arg2[%c0_1, %c0_2] : memref<2x128xf32, #tpu.memory_space<vmem>>, vector<2x128xf32>
    %c0_3 = arith.constant 0 : index
    %c0_4 = arith.constant 0 : index
    %2 = vector.load %arg3[%c0_3, %c0_4] : memref<1x128xf32, #tpu.memory_space<vmem>>, vector<1x128xf32>
    %3 = vector.extract_strided_slice %0 {offsets = [0, 0], sizes = [8, 1], strides = [1, 1]} : vector<8x2xf32> to vector<8x1xf32>
    %4 = vector.extract_strided_slice %1 {offsets = [0, 0], sizes = [1, 128], strides = [1, 1]} : vector<2x128xf32> to vector<1x128xf32>
    %5 = vector.broadcast %3 : vector<8x1xf32> to vector<8x128xf32>
    %6 = vector.broadcast %4 : vector<1x128xf32> to vector<8x128xf32>
    %7 = arith.mulf %5, %6 : vector<8x128xf32>
    %8 = vector.broadcast %2 : vector<1x128xf32> to vector<8x128xf32>
    %9 = arith.addf %8, %7 : vector<8x128xf32>
    %10 = vector.extract_strided_slice %0 {offsets = [0, 1], sizes = [8, 1], strides = [1, 1]} : vector<8x2xf32> to vector<8x1xf32>
    %11 = vector.extract_strided_slice %1 {offsets = [1, 0], sizes = [1, 128], strides = [1, 1]} : vector<2x128xf32> to vector<1x128xf32>
    %12 = vector.broadcast %10 : vector<8x1xf32> to vector<8x128xf32>
    %13 = vector.broadcast %11 : vector<1x128xf32> to vector<8x128xf32>
    %14 = arith.mulf %12, %13 : vector<8x128xf32>
    %15 = arith.addf %9, %14 : vector<8x128xf32>
    %cst = arith.constant 0.000000e+00 : f32
    %16 = vector.broadcast %cst : f32 to vector<8x128xf32>
    %17 = arith.maximumf %15, %16 : vector<8x128xf32>
    %18 = arith.truncf %17 : vector<8x128xf32> to vector<8x128xbf16>
    %c0_5 = arith.constant 0 : index
    %c0_6 = arith.constant 0 : index
    %19 = vector.load %arg4[%c0_5, %c0_6] : memref<128x128xbf16, #tpu.memory_space<vmem>>, vector<128x128xbf16>
    %cst_7 = arith.constant dense<0.000000e+00> : vector<8x128xf32>
    %20 = tpu.matmul %18, %19, %cst_7 {dimension_numbers = #tpu.dot_dimension_numbers<[1], [0], [0], [1], [0, 0, 1, 1], [], []>} : vector<8x128xbf16>, vector<128x128xbf16>, vector<8x128xf32> -> vector<8x128xf32>
    %c0_8 = arith.constant 0 : index
    %c0_9 = arith.constant 0 : index
    %21 = vector.load %arg5[%c0_8, %c0_9] : memref<1x128xf32, #tpu.memory_space<vmem>>, vector<1x128xf32>
    %22 = vector.broadcast %21 : vector<1x128xf32> to vector<8x128xf32>
    %23 = arith.addf %20, %22 : vector<8x128xf32>
    %cst_10 = arith.constant 0.000000e+00 : f32
    %24 = vector.broadcast %cst_10 : f32 to vector<8x128xf32>
    %25 = arith.maximumf %23, %24 : vector<8x128xf32>
    %26 = arith.truncf %25 : vector<8x128xf32> to vector<8x128xbf16>
    %c0_11 = arith.constant 0 : index
    %c0_12 = arith.constant 0 : index
    %27 = vector.load %arg6[%c0_11, %c0_12] : memref<128x128xbf16, #tpu.memory_space<vmem>>, vector<128x128xbf16>
    %cst_13 = arith.constant dense<0.000000e+00> : vector<8x128xf32>
    %28 = tpu.matmul %26, %27, %cst_13 {dimension_numbers = #tpu.dot_dimension_numbers<[1], [0], [0], [1], [0, 0, 1, 1], [], []>} : vector<8x128xbf16>, vector<128x128xbf16>, vector<8x128xf32> -> vector<8x128xf32>
    %c0_14 = arith.constant 0 : index
    %c0_15 = arith.constant 0 : index
    %29 = vector.load %arg7[%c0_14, %c0_15] : memref<1x128xf32, #tpu.memory_space<vmem>>, vector<1x128xf32>
    %30 = vector.broadcast %29 : vector<1x128xf32> to vector<8x128xf32>
    %31 = arith.addf %28, %30 : vector<8x128xf32>
    %cst_16 = arith.constant 0.000000e+00 : f32
    %32 = vector.broadcast %cst_16 : f32 to vector<8x128xf32>
    %33 = arith.maximumf %31, %32 : vector<8x128xf32>
    %34 = arith.truncf %33 : vector<8x128xf32> to vector<8x128xbf16>
    %c0_17 = arith.constant 0 : index
    %c0_18 = arith.constant 0 : index
    %35 = vector.load %arg8[%c0_17, %c0_18] : memref<128x8xbf16, #tpu.memory_space<vmem>>, vector<128x8xbf16>
    %cst_19 = arith.constant dense<0.000000e+00> : vector<8x8xf32>
    %36 = tpu.matmul %34, %35, %cst_19 {dimension_numbers = #tpu.dot_dimension_numbers<[1], [0], [0], [1], [0, 0, 1, 1], [], []>} : vector<8x128xbf16>, vector<128x8xbf16>, vector<8x8xf32> -> vector<8x8xf32>
    %c0_20 = arith.constant 0 : index
    %c0_21 = arith.constant 0 : index
    %37 = vector.load %arg9[%c0_20, %c0_21] : memref<1x8xf32, #tpu.memory_space<vmem>>, vector<1x8xf32>
    %38 = vector.broadcast %37 : vector<1x8xf32> to vector<8x8xf32>
    %39 = arith.addf %36, %38 : vector<8x8xf32>
    %c0_22 = arith.constant 0 : index
    %c0_23 = arith.constant 0 : index
    %40 = vector.load %arg10[%c0_22, %c0_23] : memref<8x8xf32, #tpu.memory_space<vmem>>, vector<8x8xf32>
    tpu.vector_store %arg10[%c0_22, %c0_23], %39 {strides = array<i32>} : memref<8x8xf32, #tpu.memory_space<vmem>>, vector<8x8xf32>,
    return
  }
  func.func @transform_0(%arg0: i32) -> (i32, i32) {
    %c0_i32 = arith.constant 0 : i32
    %c0_i32_0 = arith.constant 0 : i32
    return %arg0, %c0_i32 : i32, i32
  }
  func.func @transform_1(%arg0: i32) -> (i32, i32) {
    %c0_i32 = arith.constant 0 : i32
    %c0_i32_0 = arith.constant 0 : i32
    %c0_i32_1 = arith.constant 0 : i32
    return %c0_i32, %c0_i32_0 : i32, i32
  }
  func.func @transform_2(%arg0: i32) -> (i32, i32) {
    %c0_i32 = arith.constant 0 : i32
    %c0_i32_0 = arith.constant 0 : i32
    %c0_i32_1 = arith.constant 0 : i32
    return %c0_i32, %c0_i32_0 : i32, i32
  }
  func.func @transform_3(%arg0: i32) -> (i32, i32) {
    %c0_i32 = arith.constant 0 : i32
    %c0_i32_0 = arith.constant 0 : i32
    %c0_i32_1 = arith.constant 0 : i32
    return %c0_i32, %c0_i32_0 : i32, i32
  }
  func.func @transform_4(%arg0: i32) -> (i32, i32) {
    %c0_i32 = arith.constant 0 : i32
    %c0_i32_0 = arith.constant 0 : i32
    %c0_i32_1 = arith.constant 0 : i32
    return %c0_i32, %c0_i32_0 : i32, i32
  }
  func.func @transform_5(%arg0: i32) -> (i32, i32) {
    %c0_i32 = arith.constant 0 : i32
    %c0_i32_0 = arith.constant 0 : i32
    %c0_i32_1 = arith.constant 0 : i32
    return %c0_i32, %c0_i32_0 : i32, i32
  }
  func.func @transform_6(%arg0: i32) -> (i32, i32) {
    %c0_i32 = arith.constant 0 : i32
    %c0_i32_0 = arith.constant 0 : i32
    %c0_i32_1 = arith.constant 0 : i32
    return %c0_i32, %c0_i32_0 : i32, i32
  }
  func.func @transform_7(%arg0: i32) -> (i32, i32) {
    %c0_i32 = arith.constant 0 : i32
    %c0_i32_0 = arith.constant 0 : i32
    %c0_i32_1 = arith.constant 0 : i32
    return %c0_i32, %c0_i32_0 : i32, i32
  }
  func.func @transform_8(%arg0: i32) -> (i32, i32) {
    %c0_i32 = arith.constant 0 : i32
    %c0_i32_0 = arith.constant 0 : i32
    %c0_i32_1 = arith.constant 0 : i32
    return %c0_i32, %c0_i32_0 : i32, i32
  }
  func.func @transform_9(%arg0: i32) -> (i32, i32) {
    %c0_i32 = arith.constant 0 : i32
    %c0_i32_0 = arith.constant 0 : i32
    return %arg0, %c0_i32 : i32, i32
  }
}

</mosaic_0001>

<llo_original>
// kernel: tpu_custom_call.1
$region0: #{tpu_custom_call.1}
  #allocation0 [shape = 'u32[]', space=smem, size = 0x4, offset = 0x4, fixed_abs, tag = 'smem constant byte address 0x4 - core index']
  #allocation1 [shape = 'u32[144,128]{1,0:T(1,128)}', space=vmem, size = 0x12000, scoped, tag = 'internal scratch']
  %s0 = inlined_call_operand.vmem [shape: f32[8,2], index: 0, kind: input, shape index: {}]
  %s1 = inlined_call_operand.vmem [shape: f32[2,128], index: 1, kind: input, shape index: {}]
  %s2 = inlined_call_operand.vmem [shape: f32[1,128], index: 2, kind: input, shape index: {}]
  %s3 = inlined_call_operand.vmem [shape: bf16[128,128], index: 3, kind: input, shape index: {}]
  %s4 = inlined_call_operand.vmem [shape: f32[1,128], index: 4, kind: input, shape index: {}]
  %s5 = inlined_call_operand.hbm [shape: bf16[128,128], index: 5, kind: input, shape index: {}]
  %s6 = inlined_call_operand.vmem [shape: f32[1,128], index: 6, kind: input, shape index: {}]
  %s7 = inlined_call_operand.vmem [shape: bf16[128,8], index: 7, kind: input, shape index: {}]
  %s8 = inlined_call_operand.vmem [shape: f32[1,8], index: 8, kind: input, shape index: {}]
  %s9 = inlined_call_operand.hbm [shape: f32[8,8], index: 9, kind: output, shape index: {}]
  %s10 = sld [smem:[#allocation0]]
  $region50: #{tpu_custom_call.1} parent=0
    _
  %s12 = ssub.s32 1, %s10
  %s13 = scalar_select 0, %s12, %s10
  $region1: #{tpu_custom_call.1} parent=0
    #allocation2 [shape = 'u8[32768]{0}', space=vmem, size = 0x8000, scoped, tag = 'input window, operand 5, single buffered']
    #allocation3 [shape = 's32[1]{0}', space=sflag, size = 0x4, scoped, tag = 'scoped memory for tpu_custom_call.1']
    #allocation4 [shape = 's32[1]{0}', space=sflag, size = 0x4, scoped, tag = 'scoped memory for tpu_custom_call.1']
    #allocation5 [shape = 'u8[4096]{0}', space=vmem, size = 0x1000, scoped, tag = 'output window, operand 0, single buffered']
    %14 = vsyncpa [#allocation3], 0
    %15 = vsyncpa [#allocation4], 0
    // Predicated region
    $region2: #{tpu_custom_call.1} parent=1 // pred_check
      _
    $region3: #{tpu_custom_call.1} parent=1 // pred_check_branch
      %17 = sbr.rel (0) target = $region5
    $region4: #{tpu_custom_call.1} parent=1 // pred_region
      _
    $region5: #{tpu_custom_call.1} parent=1 // pred_fallthru
      _
    // Predicated region
    $region6: #{tpu_custom_call.1} parent=1 // pred_check
      _
    $region7: #{tpu_custom_call.1} parent=1 // pred_check_branch
      %19 = sbr.rel (0) target = $region9
    $region8: #{tpu_custom_call.1} parent=1 // pred_region
      _
    $region9: #{tpu_custom_call.1} parent=1 // pred_fallthru
      _
    // Predicated region
    $region10: #{tpu_custom_call.1} parent=1 // pred_check
      _
    $region11: #{tpu_custom_call.1} parent=1 // pred_check_branch
      %21 = sbr.rel (0) target = $region13
    $region12: #{tpu_custom_call.1} parent=1 // pred_region
      _
    $region13: #{tpu_custom_call.1} parent=1 // pred_fallthru
      _
    // Predicated region
    $region14: #{tpu_custom_call.1} parent=1 // pred_check
      _
    $region15: #{tpu_custom_call.1} parent=1 // pred_check_branch
      %23 = sbr.rel (0) target = $region17
    $region16: #{tpu_custom_call.1} parent=1 // pred_region
      _
    $region17: #{tpu_custom_call.1} parent=1 // pred_fallthru
      _
    // Predicated region
    $region18: #{tpu_custom_call.1} parent=1 // pred_check
      _
    $region19: #{tpu_custom_call.1} parent=1 // pred_check_branch
      %25 = sbr.rel (0) target = $region21
    $region20: #{tpu_custom_call.1} parent=1 // pred_region
      _
    $region21: #{tpu_custom_call.1} parent=1 // pred_fallthru
      _
    // Predicated region
    $region22: #{tpu_custom_call.1} parent=1 // pred_check
      _
    $region23: #{tpu_custom_call.1} parent=1 // pred_check_branch
      %27 = sbr.rel (0) target = $region25
    $region24: #{tpu_custom_call.1} parent=1 // pred_region
      %s29 = ssub.s32 1024, 1024
      %30 = vsyncadd [#allocation3], %s29
      %s31 = sshll.u32 [#allocation2], 4
      %s32 = int_to_ptr.vmem [resolvable:$true] %s31
      %37 = dma.hbm_to_vmem [thread:$0]  %s5, 1024, %s32, [#allocation3], 64, 64, 4
    $region25: #{tpu_custom_call.1} parent=1 // pred_fallthru
      _
    // Predicated region
    $region26: #{tpu_custom_call.1} parent=1 // pred_check
      _
    $region27: #{tpu_custom_call.1} parent=1 // pred_check_branch
      %39 = sbr.rel (0) target = $region29
    $region28: #{tpu_custom_call.1} parent=1 // pred_region
      _
    $region29: #{tpu_custom_call.1} parent=1 // pred_fallthru
      _
    // Predicated region
    $region30: #{tpu_custom_call.1} parent=1 // pred_check
      _
    $region31: #{tpu_custom_call.1} parent=1 // pred_check_branch
      %41 = sbr.rel (0) target = $region33
    $region32: #{tpu_custom_call.1} parent=1 // pred_region
      _
    $region33: #{tpu_custom_call.1} parent=1 // pred_fallthru
      _
    // Predicated region
    $region34: #{tpu_custom_call.1} parent=1 // pred_check
      _
    $region35: #{tpu_custom_call.1} parent=1 // pred_check_branch
      %43 = sbr.rel (0) target = $region37
    $region36: #{tpu_custom_call.1} parent=1 // pred_region
      _
    $region37: #{tpu_custom_call.1} parent=1 // pred_fallthru
      _
    // Predicated region
    $region38: #{tpu_custom_call.1} parent=1 // pred_check
      _
    $region39: #{tpu_custom_call.1} parent=1 // pred_check_branch
      %45 = sbr.rel (0) target = $region41
    $region40: #{tpu_custom_call.1} parent=1 // pred_region
      %46 = dma.done [#allocation3], 1024
    $region41: #{tpu_custom_call.1} parent=1 // pred_fallthru
      _
    %v48 = vld [vmem:[%s0] sm:$0xff]
    %v49 = vld [vmem:[%s1] sm:$0x3]
    %v50 = vld [vmem:[%s2] sm:$0x1]
    %52 = vset.pattern.permute.xlu0 0
    %53 = vperm.xlu0 %52, %v48
    %v54 = vpop.permute.xlu0 %53
    %v56 = vlaneseq
    %v57 = vshrl.u32 %v56, 7
    %v58 = vsub.s32 0, %v57
    %v59 = vrot.slane %v49, %v58
    %v60 = vmul.f32 %v54, %v59
    %v62 = vlaneseq
    %v63 = vshrl.u32 %v62, 7
    %v64 = vsub.s32 0, %v63
    %v65 = vrot.slane %v50, %v64
    %v67 = vadd.f32 %v65, %v60
    %68 = vset.pattern.permute.xlu0 1
    %69 = vperm.xlu0 %68, %v48
    %v70 = vpop.permute.xlu0 %69
    %v72 = vlaneseq
    %v73 = vshrl.u32 %v72, 7
    %v74 = vsub.s32 1, %v73
    %v75 = vrot.slane %v49, %v74
    %v76 = vmul.f32 %v70, %v75
    %v77 = vadd.f32 %v67, %v76
    %v78 = vmax.f32 %v77, 0.0
    %v79 = vpack.c.bf16 %v78, %v78
    %v80 = vld [vmem:[%s3] sm:$0xf]
    %v81 = vld [vmem:[%s3 + $0x4] sm:$0xf]
    %v82 = vld [vmem:[%s3 + $0x8] sm:$0xf]
    %v83 = vld [vmem:[%s3 + $0xc] sm:$0xf]
    %v84 = vld [vmem:[%s3 + $0x10] sm:$0xf]
    %v85 = vld [vmem:[%s3 + $0x14] sm:$0xf]
    %v86 = vld [vmem:[%s3 + $0x18] sm:$0xf]
    %v87 = vld [vmem:[%s3 + $0x1c] sm:$0xf]
    %v88 = vld [vmem:[%s3 + $0x20] sm:$0xf]
    %v89 = vld [vmem:[%s3 + $0x24] sm:$0xf]
    %v90 = vld [vmem:[%s3 + $0x28] sm:$0xf]
    %v91 = vld [vmem:[%s3 + $0x2c] sm:$0xf]
    %v92 = vld [vmem:[%s3 + $0x30] sm:$0xf]
    %v93 = vld [vmem:[%s3 + $0x34] sm:$0xf]
    %v94 = vld [vmem:[%s3 + $0x38] sm:$0xf]
    %v95 = vld [vmem:[%s3 + $0x3c] sm:$0xf]
    %v96 = vld [vmem:[%s4] sm:$0x1]
    %v98 = vlaneseq
    %v99 = vshrl.u32 %v98, 7
    %v100 = vsub.s32 0, %v99
    %v101 = vrot.slane %v96, %v100
    %v119 = vunpack.c.l.b16 %v80
    %v120 = vunpack.c.l.b16 %v81
    %v121 = vunpack.c.l.b16 %v82
    %v122 = vunpack.c.l.b16 %v83
    %v123 = vunpack.c.l.b16 %v84
    %v124 = vunpack.c.l.b16 %v85
    %v125 = vunpack.c.l.b16 %v86
    %v126 = vunpack.c.l.b16 %v87
    %v127 = vunpack.c.l.b16 %v88
    %v128 = vunpack.c.l.b16 %v89
    %v129 = vunpack.c.l.b16 %v90
    %v130 = vunpack.c.l.b16 %v91
    %v131 = vunpack.c.l.b16 %v92
    %v132 = vunpack.c.l.b16 %v93
    %v133 = vunpack.c.l.b16 %v94
    %v134 = vunpack.c.l.b16 %v95
    %v135 = vpack.c.b16 %v120, %v119
    %v136 = vpack.c.b16 %v122, %v121
    %v137 = vpack.c.b16 %v124, %v123
    %v138 = vpack.c.b16 %v126, %v125
    %v139 = vpack.c.b16 %v128, %v127
    %v140 = vpack.c.b16 %v130, %v129
    %v141 = vpack.c.b16 %v132, %v131
    %v142 = vpack.c.b16 %v134, %v133
    %151 = vmatprep.subr.bf16.mxu0 0
    %152 = vmatpush1.bf16.msra.mxu0 %v142
    %153 = vmatprep.subr.bf16.mxu0 0
    %154 = vmatpush1.bf16.msra.mxu0 %v141
    %155 = vmatprep.subr.bf16.mxu0 0
    %156 = vmatpush1.bf16.msra.mxu0 %v140
    %157 = vmatprep.subr.bf16.mxu0 0
    %158 = vmatpush1.bf16.msra.mxu0 %v139
    %159 = vmatprep.subr.bf16.mxu0 0
    %160 = vmatpush1.bf16.msra.mxu0 %v138
    %161 = vmatprep.subr.bf16.mxu0 0
    %162 = vmatpush1.bf16.msra.mxu0 %v137
    %163 = vmatprep.subr.bf16.mxu0 0
    %164 = vmatpush1.bf16.msra.mxu0 %v136
    %165 = vmatprep.subr.bf16.mxu0 0
    %166 = vmatpush1.bf16.msra.mxu0 %v135
    %167 = vmatprep.subr.bf16.mxu0 0
    %168 = vmatpush2.bf16.msra.mxu0 0
    %169 = vmatprep.subr.bf16.mxu0 0
    %170 = vmatpush2.bf16.msra.mxu0 0
    %171 = vmatprep.subr.bf16.mxu0 0
    %172 = vmatpush2.bf16.msra.mxu0 0
    %173 = vmatprep.subr.bf16.mxu0 0
    %174 = vmatpush2.bf16.msra.mxu0 0
    %175 = vmatprep.subr.bf16.mxu0 0
    %176 = vmatpush2.bf16.msra.mxu0 0
    %177 = vmatprep.subr.bf16.mxu0 0
    %178 = vmatpush2.bf16.msra.mxu0 0
    %179 = vmatprep.subr.bf16.mxu0 0
    %180 = vmatpush2.bf16.msra.mxu0 0
    %181 = vmatprep.subr.bf16.mxu0 0
    %182 = vmatpush2.bf16.msra.mxu0 0
    %183 = vmatprep.mubr.bf16.mxu0 0
    %184 = vmatmul.mubr.bf16.gmra.mxu0 %v79
    %v185 = vpop.f32.mrf.mxu0
    %v186 = vadd.f32 %v101, %v185
    %v187 = vpop.f32.mrf.mxu0
    %v188 = vpop.f32.mrf.mxu0
    %v189 = vpop.f32.mrf.mxu0
    %190 = vdwg.mxu0
    %v191 = vmax.f32 %v186, 0.0
    %v192 = vpack.c.bf16 %v191, %v191
    %v193 = vld [vmem:[#allocation2] sm:$0xf]
    %v194 = vld [vmem:[#allocation2 + $0x4] sm:$0xf]
    %v195 = vld [vmem:[#allocation2 + $0x8] sm:$0xf]
    %v196 = vld [vmem:[#allocation2 + $0xc] sm:$0xf]
    %v197 = vld [vmem:[#allocation2 + $0x10] sm:$0xf]
    %v198 = vld [vmem:[#allocation2 + $0x14] sm:$0xf]
    %v199 = vld [vmem:[#allocation2 + $0x18] sm:$0xf]
    %v200 = vld [vmem:[#allocation2 + $0x1c] sm:$0xf]
    %v201 = vld [vmem:[#allocation2 + $0x20] sm:$0xf]
    %v202 = vld [vmem:[#allocation2 + $0x24] sm:$0xf]
    %v203 = vld [vmem:[#allocation2 + $0x28] sm:$0xf]
    %v204 = vld [vmem:[#allocation2 + $0x2c] sm:$0xf]
    %v205 = vld [vmem:[#allocation2 + $0x30] sm:$0xf]
    %v206 = vld [vmem:[#allocation2 + $0x34] sm:$0xf]
    %v207 = vld [vmem:[#allocation2 + $0x38] sm:$0xf]
    %v208 = vld [vmem:[#allocation2 + $0x3c] sm:$0xf]
    %v209 = vld [vmem:[%s6] sm:$0x1]
    %v211 = vlaneseq
    %v212 = vshrl.u32 %v211, 7
    %v213 = vsub.s32 0, %v212
    %v214 = vrot.slane %v209, %v213
    %v232 = vunpack.c.l.b16 %v193
    %v233 = vunpack.c.l.b16 %v194
    %v234 = vunpack.c.l.b16 %v195
    %v235 = vunpack.c.l.b16 %v196
    %v236 = vunpack.c.l.b16 %v197
    %v237 = vunpack.c.l.b16 %v198
    %v238 = vunpack.c.l.b16 %v199
    %v239 = vunpack.c.l.b16 %v200
    %v240 = vunpack.c.l.b16 %v201
    %v241 = vunpack.c.l.b16 %v202
    %v242 = vunpack.c.l.b16 %v203
    %v243 = vunpack.c.l.b16 %v204
    %v244 = vunpack.c.l.b16 %v205
    %v245 = vunpack.c.l.b16 %v206
    %v246 = vunpack.c.l.b16 %v207
    %v247 = vunpack.c.l.b16 %v208
    %v248 = vpack.c.b16 %v233, %v232
    %v249 = vpack.c.b16 %v235, %v234
    %v250 = vpack.c.b16 %v237, %v236
    %v251 = vpack.c.b16 %v239, %v238
    %v252 = vpack.c.b16 %v241, %v240
    %v253 = vpack.c.b16 %v243, %v242
    %v254 = vpack.c.b16 %v245, %v244
    %v255 = vpack.c.b16 %v247, %v246
    %264 = vmatprep.subr.bf16.mxu0 0
    %265 = vmatpush1.bf16.msra.mxu0 %v255
    %266 = vmatprep.subr.bf16.mxu0 0
    %267 = vmatpush1.bf16.msra.mxu0 %v254
    %268 = vmatprep.subr.bf16.mxu0 0
    %269 = vmatpush1.bf16.msra.mxu0 %v253
    %270 = vmatprep.subr.bf16.mxu0 0
    %271 = vmatpush1.bf16.msra.mxu0 %v252
    %272 = vmatprep.subr.bf16.mxu0 0
    %273 = vmatpush1.bf16.msra.mxu0 %v251
    %274 = vmatprep.subr.bf16.mxu0 0
    %275 = vmatpush1.bf16.msra.mxu0 %v250
    %276 = vmatprep.subr.bf16.mxu0 0
    %277 = vmatpush1.bf16.msra.mxu0 %v249
    %278 = vmatprep.subr.bf16.mxu0 0
    %279 = vmatpush1.bf16.msra.mxu0 %v248
    %280 = vmatprep.subr.bf16.mxu0 0
    %281 = vmatpush2.bf16.msra.mxu0 0
    %282 = vmatprep.subr.bf16.mxu0 0
    %283 = vmatpush2.bf16.msra.mxu0 0
    %284 = vmatprep.subr.bf16.mxu0 0
    %285 = vmatpush2.bf16.msra.mxu0 0
    %286 = vmatprep.subr.bf16.mxu0 0
    %287 = vmatpush2.bf16.msra.mxu0 0
    %288 = vmatprep.subr.bf16.mxu0 0
    %289 = vmatpush2.bf16.msra.mxu0 0
    %290 = vmatprep.subr.bf16.mxu0 0
    %291 = vmatpush2.bf16.msra.mxu0 0
    %292 = vmatprep.subr.bf16.mxu0 0
    %293 = vmatpush2.bf16.msra.mxu0 0
    %294 = vmatprep.subr.bf16.mxu0 0
    %295 = vmatpush2.bf16.msra.mxu0 0
    %296 = vmatprep.mubr.bf16.mxu0 0
    %297 = vmatmul.mubr.bf16.gmra.mxu0 %v192
    %v298 = vpop.f32.mrf.mxu0
    %v299 = vadd.f32 %v214, %v298
    %v300 = vpop.f32.mrf.mxu0
    %v301 = vpop.f32.mrf.mxu0
    %v302 = vpop.f32.mrf.mxu0
    %303 = vdwg.mxu0
    %v304 = vmax.f32 %v299, 0.0
    %v305 = vpack.c.bf16 %v304, %v304
    %v306 = vld [vmem:[%s7] sm:$0xf]
    %v307 = vld [vmem:[%s7 + $0x4] sm:$0xf]
    %v308 = vld [vmem:[%s7 + $0x8] sm:$0xf]
    %v309 = vld [vmem:[%s7 + $0xc] sm:$0xf]
    %v310 = vld [vmem:[%s7 + $0x10] sm:$0xf]
    %v311 = vld [vmem:[%s7 + $0x14] sm:$0xf]
    %v312 = vld [vmem:[%s7 + $0x18] sm:$0xf]
    %v313 = vld [vmem:[%s7 + $0x1c] sm:$0xf]
    %v314 = vld [vmem:[%s7 + $0x20] sm:$0xf]
    %v315 = vld [vmem:[%s7 + $0x24] sm:$0xf]
    %v316 = vld [vmem:[%s7 + $0x28] sm:$0xf]
    %v317 = vld [vmem:[%s7 + $0x2c] sm:$0xf]
    %v318 = vld [vmem:[%s7 + $0x30] sm:$0xf]
    %v319 = vld [vmem:[%s7 + $0x34] sm:$0xf]
    %v320 = vld [vmem:[%s7 + $0x38] sm:$0xf]
    %v321 = vld [vmem:[%s7 + $0x3c] sm:$0xf]
    %v322 = vld [vmem:[%s8] sm:$0x1]
    %v324 = vlaneseq
    %v325 = vshrl.u32 %v324, 7
    %v326 = vsub.s32 0, %v325
    %v327 = vrot.slane %v322, %v326
    %v345 = vunpack.c.l.b16 %v306
    %v346 = vunpack.c.l.b16 %v307
    %v347 = vunpack.c.l.b16 %v308
    %v348 = vunpack.c.l.b16 %v309
    %v349 = vunpack.c.l.b16 %v310
    %v350 = vunpack.c.l.b16 %v311
    %v351 = vunpack.c.l.b16 %v312
    %v352 = vunpack.c.l.b16 %v313
    %v353 = vunpack.c.l.b16 %v314
    %v354 = vunpack.c.l.b16 %v315
    %v355 = vunpack.c.l.b16 %v316
    %v356 = vunpack.c.l.b16 %v317
    %v357 = vunpack.c.l.b16 %v318
    %v358 = vunpack.c.l.b16 %v319
    %v359 = vunpack.c.l.b16 %v320
    %v360 = vunpack.c.l.b16 %v321
    %v361 = vpack.c.b16 %v346, %v345
    %v362 = vpack.c.b16 %v348, %v347
    %v363 = vpack.c.b16 %v350, %v349
    %v364 = vpack.c.b16 %v352, %v351
    %v365 = vpack.c.b16 %v354, %v353
    %v366 = vpack.c.b16 %v356, %v355
    %v367 = vpack.c.b16 %v358, %v357
    %v368 = vpack.c.b16 %v360, %v359
    %377 = vmatprep.subr.bf16.mxu0 0
    %378 = vmatpush1.bf16.msra.mxu0 %v368
    %379 = vmatprep.subr.bf16.mxu0 0
    %380 = vmatpush1.bf16.msra.mxu0 %v367
    %381 = vmatprep.subr.bf16.mxu0 0
    %382 = vmatpush1.bf16.msra.mxu0 %v366
    %383 = vmatprep.subr.bf16.mxu0 0
    %384 = vmatpush1.bf16.msra.mxu0 %v365
    %385 = vmatprep.subr.bf16.mxu0 0
    %386 = vmatpush1.bf16.msra.mxu0 %v364
    %387 = vmatprep.subr.bf16.mxu0 0
    %388 = vmatpush1.bf16.msra.mxu0 %v363
    %389 = vmatprep.subr.bf16.mxu0 0
    %390 = vmatpush1.bf16.msra.mxu0 %v362
    %391 = vmatprep.subr.bf16.mxu0 0
    %392 = vmatpush1.bf16.msra.mxu0 %v361
    %393 = vmatprep.subr.bf16.mxu0 0
    %394 = vmatpush2.bf16.msra.mxu0 0
    %395 = vmatprep.subr.bf16.mxu0 0
    %396 = vmatpush2.bf16.msra.mxu0 0
    %397 = vmatprep.subr.bf16.mxu0 0
    %398 = vmatpush2.bf16.msra.mxu0 0
    %399 = vmatprep.subr.bf16.mxu0 0
    %400 = vmatpush2.bf16.msra.mxu0 0
    %401 = vmatprep.subr.bf16.mxu0 0
    %402 = vmatpush2.bf16.msra.mxu0 0
    %403 = vmatprep.subr.bf16.mxu0 0
    %404 = vmatpush2.bf16.msra.mxu0 0
    %405 = vmatprep.subr.bf16.mxu0 0
    %406 = vmatpush2.bf16.msra.mxu0 0
    %407 = vmatprep.subr.bf16.mxu0 0
    %408 = vmatpush2.bf16.msra.mxu0 0
    %409 = vmatprep.mubr.bf16.mxu0 0
    %410 = vmatmul.mubr.bf16.gmra.mxu0 %v305
    %v411 = vpop.f32.mrf.mxu0
    %v412 = vadd.f32 %v327, %v411
    %v413 = vpop.f32.mrf.mxu0
    %v414 = vpop.f32.mrf.mxu0
    %v415 = vpop.f32.mrf.mxu0
    %416 = vdwg.mxu0
    %vm417 = vcmask 64512
    %418 = vst.msk [vmem:[#allocation5] sm:$0xff] %vm417, %v412
    // Predicated region
    $region42: #{tpu_custom_call.1} parent=1 // pred_check
      _
    $region43: #{tpu_custom_call.1} parent=1 // pred_check_branch
      %420 = sbr.rel (0) target = $region45
    $region44: #{tpu_custom_call.1} parent=1 // pred_region
      %s422 = ssub.s32 128, 128
      %423 = vsyncadd [#allocation4], %s422
      %s425 = sshll.u32 [#allocation5], 4
      %s426 = int_to_ptr.vmem [resolvable:$true] %s425
      %428 = dma.vmem_to_hbm [thread:$0]  %s426, 128, %s9, [#allocation4]
    $region45: #{tpu_custom_call.1} parent=1 // pred_fallthru
      _
    // Predicated region
    $region46: #{tpu_custom_call.1} parent=1 // pred_check
      _
    $region47: #{tpu_custom_call.1} parent=1 // pred_check_branch
      %430 = sbr.rel (0) target = $region49
    $region48: #{tpu_custom_call.1} parent=1 // pred_region
      %431 = dma.done [#allocation4], 128
    $region49: #{tpu_custom_call.1} parent=1 // pred_fallthru
      _
    %432 = vsyncpa [#allocation3], 1
    %433 = vsyncpa [#allocation4], 1

</llo_original>
